<compile_context>
chip_gen: v7x
topology: tpu7x:2x2x1
jax: 0.10.0
libtpu: 0.0.40
codegen_flags: <defaults>
</compile_context>

<pallas_src>
from functools import partial

import jax
import jax.numpy as jnp
from jax import lax
from jax.experimental import pallas as pl
from jax.experimental.pallas import tpu as pltpu


def _attention_kernel(x_ref, wq_ref, wk_ref, wv_ref, wo_ref,
                      bq_ref, bk_ref, bv_ref, bo_ref, o_ref, *, batch, seq):
    # Everything is resident in VMEM; single invocation handles all batches.
    x2 = x_ref[...]                                   # (B*S, D) f32

    wq = wq_ref[...]                                  # (D, D), (in, out) layout
    wk = wk_ref[...]
    wv = wv_ref[...]
    wo = wo_ref[...]
    bq = bq_ref[...]                                  # (1, D)
    bk = bk_ref[...]
    bv = bv_ref[...]
    bo = bo_ref[...]

    # --- Fused projections: one MXU matmul each over all B*S rows ---------
    q2 = jnp.dot(x2, wq, preferred_element_type=jnp.float32) + bq   # (B*S, D)
    k2 = jnp.dot(x2, wk, preferred_element_type=jnp.float32) + bk
    v2 = jnp.dot(x2, wv, preferred_element_type=jnp.float32) + bv

    d = x2.shape[-1]
    # Leading-dim split only (minor dims preserved) -> layout no-op.
    q = q2.reshape(batch, seq, d)
    k = k2.reshape(batch, seq, d)
    v = v2.reshape(batch, seq, d)

    # --- Scores: batched q @ k^T with the transpose folded into dot_general
    # (no 1/sqrt(d) scaling -- matches the PyTorch module).
    scores = lax.dot_general(
        q, k,
        dimension_numbers=(((2,), (2,)), ((0,), (0,))),
        preferred_element_type=jnp.float32)                          # (B, S, S)

    # --- Softmax (max-subtracted), normalization deferred until after PV ---
    m = jnp.max(scores, axis=-1, keepdims=True)                      # (B, S, 1)
    e = jnp.exp(scores - m)                                          # (B, S, S)
    denom = jnp.sum(e, axis=-1, keepdims=True)                       # (B, S, 1)

    # --- PV matmul first, then scale (S, D) rows by 1/denom (EUP recip) ----
    av = lax.dot_general(
        e, v,
        dimension_numbers=(((2,), (1,)), ((0,), (0,))),
        preferred_element_type=jnp.float32)                          # (B, S, D)
    av = av * pl.reciprocal(denom, approx=True)

    # --- Output projection, fused over all B*S rows ------------------------
    av2 = av.reshape(batch * seq, d)                                 # merge leading dims
    out = jnp.dot(av2, wo, preferred_element_type=jnp.float32) + bo  # (B*S, D)

    o_ref[...] = out.astype(o_ref.dtype)


def attention_pallas(x, wq, wk, wv, wo, bq, bk, bv, bo):
    """x: (B, S, D); w*: (D, D) in (in, out) layout; b*: (1, D)."""
    B, S, D = x.shape
    # Wrapper-side reshape (free): feed the kernel one (B*S, D) slab so the
    # projections are single MXU matmuls over all rows.
    x2 = x.reshape(B * S, D)

    vmem = pl.BlockSpec(memory_space=pltpu.MemorySpace.VMEM)
    kernel = partial(_attention_kernel, batch=B, seq=S)

    out2 = pl.pallas_call(
        kernel,
        out_shape=jax.ShapeDtypeStruct((B * S, D), x.dtype),
        in_specs=[vmem] * 9,
        out_specs=vmem,
        compiler_params=pltpu.CompilerParams(
            vmem_limit_bytes=32 * 1024 * 1024),
    )(x2, wq, wk, wv, wo, bq, bk, bv, bo)

    return out2.reshape(B, S, D)


def attention_ref(x, wq, wk, wv, wo, bq, bk, bv, bo):
    q = x @ wq + bq
    k = x @ wk + bk
    v = x @ wv + bv
    scores = jnp.einsum('bqd,bkd->bqk', q, k)
    attn = jax.nn.softmax(scores, axis=-1)
    av = jnp.einsum('bqk,bkd->bqd', attn, v)
    return av @ wo + bo


if __name__ == "__main__":
    B, S, D = 2, 8, 32   # batch, seq, input_dim

    key = jax.random.PRNGKey(0)
    ks = jax.random.split(key, 9)

    x = jax.random.normal(ks[0], (B, S, D), dtype=jnp.float32)

    # Deterministic parameter init (PyTorch Linear shapes: weight (D,D), bias (D,)).
    # Stored pre-transposed to (in, out); for square random init the transpose
    # is just a relabeling.
    scale = 1.0 / jnp.sqrt(jnp.float32(D))
    wq = jax.random.uniform(ks[1], (D, D), jnp.float32, -scale, scale)
    wk = jax.random.uniform(ks[2], (D, D), jnp.float32, -scale, scale)
    wv = jax.random.uniform(ks[3], (D, D), jnp.float32, -scale, scale)
    wo = jax.random.uniform(ks[4], (D, D), jnp.float32, -scale, scale)
    bq = jax.random.uniform(ks[5], (1, D), jnp.float32, -scale, scale)
    bk = jax.random.uniform(ks[6], (1, D), jnp.float32, -scale, scale)
    bv = jax.random.uniform(ks[7], (1, D), jnp.float32, -scale, scale)
    bo = jax.random.uniform(ks[8], (1, D), jnp.float32, -scale, scale)

    out = attention_pallas(x, wq, wk, wv, wo, bq, bk, bv, bo)
    out = jax.block_until_ready(out)

    ref = attention_ref(x, wq, wk, wv, wo, bq, bk, bv, bo)
    assert out.shape == (B, S, D)
    # Tolerance loosened slightly vs. exact f32 because the softmax denominator
    # uses the EUP approximate reciprocal (pl.reciprocal(approx=True)).
    assert jnp.allclose(out, ref, atol=1e-2, rtol=1e-2), \
        f"max abs err {jnp.max(jnp.abs(out - ref))}"

    print("KERNEL_OK")
</pallas_src>

<mosaic_0001>
module attributes {stable_mosaic.version = 11 : i64} {
  func.func @_attention_kernel(%arg0: memref<16x32xf32, #tpu.memory_space<vmem>>, %arg1: memref<32x32xf32, #tpu.memory_space<vmem>>, %arg2: memref<32x32xf32, #tpu.memory_space<vmem>>, %arg3: memref<32x32xf32, #tpu.memory_space<vmem>>, %arg4: memref<32x32xf32, #tpu.memory_space<vmem>>, %arg5: memref<1x32xf32, #tpu.memory_space<vmem>>, %arg6: memref<1x32xf32, #tpu.memory_space<vmem>>, %arg7: memref<1x32xf32, #tpu.memory_space<vmem>>, %arg8: memref<1x32xf32, #tpu.memory_space<vmem>>, %arg9: memref<16x32xf32, #tpu.memory_space<vmem>>) attributes {dimension_semantics = [], scalar_prefetch = 0 : i64, scratch_operands = 0 : i64, tpu.core_type = #tpu.core_type<tc>} {
    %c0 = arith.constant 0 : index
    %c0_0 = arith.constant 0 : index
    %0 = vector.load %arg0[%c0, %c0_0] : memref<16x32xf32, #tpu.memory_space<vmem>>, vector<16x32xf32>
    %c0_1 = arith.constant 0 : index
    %c0_2 = arith.constant 0 : index
    %1 = vector.load %arg1[%c0_1, %c0_2] : memref<32x32xf32, #tpu.memory_space<vmem>>, vector<32x32xf32>
    %c0_3 = arith.constant 0 : index
    %c0_4 = arith.constant 0 : index
    %2 = vector.load %arg2[%c0_3, %c0_4] : memref<32x32xf32, #tpu.memory_space<vmem>>, vector<32x32xf32>
    %c0_5 = arith.constant 0 : index
    %c0_6 = arith.constant 0 : index
    %3 = vector.load %arg3[%c0_5, %c0_6] : memref<32x32xf32, #tpu.memory_space<vmem>>, vector<32x32xf32>
    %c0_7 = arith.constant 0 : index
    %c0_8 = arith.constant 0 : index
    %4 = vector.load %arg4[%c0_7, %c0_8] : memref<32x32xf32, #tpu.memory_space<vmem>>, vector<32x32xf32>
    %c0_9 = arith.constant 0 : index
    %c0_10 = arith.constant 0 : index
    %5 = vector.load %arg5[%c0_9, %c0_10] : memref<1x32xf32, #tpu.memory_space<vmem>>, vector<1x32xf32>
    %c0_11 = arith.constant 0 : index
    %c0_12 = arith.constant 0 : index
    %6 = vector.load %arg6[%c0_11, %c0_12] : memref<1x32xf32, #tpu.memory_space<vmem>>, vector<1x32xf32>
    %c0_13 = arith.constant 0 : index
    %c0_14 = arith.constant 0 : index
    %7 = vector.load %arg7[%c0_13, %c0_14] : memref<1x32xf32, #tpu.memory_space<vmem>>, vector<1x32xf32>
    %c0_15 = arith.constant 0 : index
    %c0_16 = arith.constant 0 : index
    %8 = vector.load %arg8[%c0_15, %c0_16] : memref<1x32xf32, #tpu.memory_space<vmem>>, vector<1x32xf32>
    %cst = arith.constant dense<0.000000e+00> : vector<16x32xf32>
    %9 = tpu.matmul %0, %1, %cst {dimension_numbers = #tpu.dot_dimension_numbers<[1], [0], [0], [1], [0, 0, 1, 1], [], []>} : vector<16x32xf32>, vector<32x32xf32>, vector<16x32xf32> -> vector<16x32xf32>
    %10 = vector.broadcast %5 : vector<1x32xf32> to vector<16x32xf32>
    %11 = arith.addf %9, %10 : vector<16x32xf32>
    %cst_17 = arith.constant dense<0.000000e+00> : vector<16x32xf32>
    %12 = tpu.matmul %0, %2, %cst_17 {dimension_numbers = #tpu.dot_dimension_numbers<[1], [0], [0], [1], [0, 0, 1, 1], [], []>} : vector<16x32xf32>, vector<32x32xf32>, vector<16x32xf32> -> vector<16x32xf32>
    %13 = vector.broadcast %6 : vector<1x32xf32> to vector<16x32xf32>
    %14 = arith.addf %12, %13 : vector<16x32xf32>
    %cst_18 = arith.constant dense<0.000000e+00> : vector<16x32xf32>
    %15 = tpu.matmul %0, %3, %cst_18 {dimension_numbers = #tpu.dot_dimension_numbers<[1], [0], [0], [1], [0, 0, 1, 1], [], []>} : vector<16x32xf32>, vector<32x32xf32>, vector<16x32xf32> -> vector<16x32xf32>
    %16 = vector.broadcast %7 : vector<1x32xf32> to vector<16x32xf32>
    %17 = arith.addf %15, %16 : vector<16x32xf32>
    %18 = vector.shape_cast %11 : vector<16x32xf32> to vector<2x8x32xf32>
    %19 = vector.shape_cast %14 : vector<16x32xf32> to vector<2x8x32xf32>
    %20 = vector.shape_cast %17 : vector<16x32xf32> to vector<2x8x32xf32>
    %cst_19 = arith.constant dense<0.000000e+00> : vector<2x8x8xf32>
    %21 = tpu.matmul %18, %19, %cst_19 {dimension_numbers = #tpu.dot_dimension_numbers<[2], [2], [1], [1], [0, 0, 0, 1, 1, 1], [0], [0]>} : vector<2x8x32xf32>, vector<2x8x32xf32>, vector<2x8x8xf32> -> vector<2x8x8xf32>
    %cst_20 = arith.constant dense<0xFF800000> : vector<2x8xf32>
    %22 = vector.multi_reduction <maximumf>, %21, %cst_20 [2] : vector<2x8x8xf32> to vector<2x8xf32>
    %23 = vector.shape_cast %22 : vector<2x8xf32> to vector<2x8x1xf32>
    %24 = vector.broadcast %23 : vector<2x8x1xf32> to vector<2x8x8xf32>
    %25 = arith.subf %21, %24 : vector<2x8x8xf32>
    %26 = math.exp %25 : vector<2x8x8xf32>
    %cst_21 = arith.constant dense<0.000000e+00> : vector<2x8xf32>
    %27 = vector.multi_reduction <add>, %26, %cst_21 [2] : vector<2x8x8xf32> to vector<2x8xf32>
    %28 = vector.shape_cast %27 : vector<2x8xf32> to vector<2x8x1xf32>
    %cst_22 = arith.constant dense<0.000000e+00> : vector<2x8x32xf32>
    %29 = tpu.matmul %26, %20, %cst_22 {dimension_numbers = #tpu.dot_dimension_numbers<[2], [1], [1], [2], [0, 0, 0, 1, 1, 2], [0], [0]>} : vector<2x8x8xf32>, vector<2x8x32xf32>, vector<2x8x32xf32> -> vector<2x8x32xf32>
    %30 = tpu.reciprocal %28 {approx = true} : vector<2x8x1xf32> -> vector<2x8x1xf32>
    %31 = vector.broadcast %30 : vector<2x8x1xf32> to vector<2x8x32xf32>
    %32 = arith.mulf %29, %31 : vector<2x8x32xf32>
    %33 = vector.shape_cast %32 : vector<2x8x32xf32> to vector<16x32xf32>
    %cst_23 = arith.constant dense<0.000000e+00> : vector<16x32xf32>
    %34 = tpu.matmul %33, %4, %cst_23 {dimension_numbers = #tpu.dot_dimension_numbers<[1], [0], [0], [1], [0, 0, 1, 1], [], []>} : vector<16x32xf32>, vector<32x32xf32>, vector<16x32xf32> -> vector<16x32xf32>
    %35 = vector.broadcast %8 : vector<1x32xf32> to vector<16x32xf32>
    %36 = arith.addf %34, %35 : vector<16x32xf32>
    %c0_24 = arith.constant 0 : index
    %c0_25 = arith.constant 0 : index
    %37 = vector.load %arg9[%c0_24, %c0_25] : memref<16x32xf32, #tpu.memory_space<vmem>>, vector<16x32xf32>
    tpu.vector_store %arg9[%c0_24, %c0_25], %36 {strides = array<i32>} : memref<16x32xf32, #tpu.memory_space<vmem>>, vector<16x32xf32>,
    return
  }
}

</mosaic_0001>

<llo_original>
// kernel: tpu_custom_call.1
$region0: #{tpu_custom_call.1}
  #allocation0 [shape = 'u32[]', space=smem, size = 0x4, offset = 0x4, fixed_abs, tag = 'smem constant byte address 0x4 - core index']
  #allocation1 [shape = 'u32[144,128]{1,0:T(1,128)}', space=vmem, size = 0x12000, scoped, tag = 'internal scratch']
  %s0 = inlined_call_operand.hbm [shape: f32[16,32], index: 0, kind: input, shape index: {}]
  %s1 = inlined_call_operand.hbm [shape: f32[32,32], index: 1, kind: input, shape index: {}]
  %s2 = inlined_call_operand.hbm [shape: f32[32,32], index: 2, kind: input, shape index: {}]
  %s3 = inlined_call_operand.hbm [shape: f32[32,32], index: 3, kind: input, shape index: {}]
  %s4 = inlined_call_operand.hbm [shape: f32[32,32], index: 4, kind: input, shape index: {}]
  %s5 = inlined_call_operand.vmem [shape: f32[1,32], index: 5, kind: input, shape index: {}]
  %s6 = inlined_call_operand.vmem [shape: f32[1,32], index: 6, kind: input, shape index: {}]
  %s7 = inlined_call_operand.vmem [shape: f32[1,32], index: 7, kind: input, shape index: {}]
  %s8 = inlined_call_operand.vmem [shape: f32[1,32], index: 8, kind: input, shape index: {}]
  %s9 = inlined_call_operand.hbm [shape: f32[16,32], index: 9, kind: output, shape index: {}]
  %s10 = sld [smem:[#allocation0]]
  $region66: #{tpu_custom_call.1} parent=0
    _
  %s12 = ssub.s32 1, %s10
  %s13 = scalar_select 0, %s12, %s10
  $region1: #{tpu_custom_call.1} parent=0
    #allocation2 [shape = 'u8[8192]{0}', space=vmem, size = 0x2000, scoped, tag = 'input window, operand 0, single buffered']
    #allocation3 [shape = 's32[1]{0}', space=sflag, size = 0x4, scoped, tag = 'scoped memory for tpu_custom_call.1']
    #allocation4 [shape = 's32[1]{0}', space=sflag, size = 0x4, scoped, tag = 'scoped memory for tpu_custom_call.1']
    #allocation5 [shape = 'u8[16384]{0}', space=vmem, size = 0x4000, scoped, tag = 'input window, operand 1, single buffered']
    #allocation6 [shape = 's32[1]{0}', space=sflag, size = 0x4, scoped, tag = 'scoped memory for tpu_custom_call.1']
    #allocation7 [shape = 'u8[16384]{0}', space=vmem, size = 0x4000, scoped, tag = 'input window, operand 2, single buffered']
    #allocation8 [shape = 'u8[16384]{0}', space=vmem, size = 0x4000, scoped, tag = 'input window, operand 3, single buffered']
    #allocation9 [shape = 's32[1]{0}', space=sflag, size = 0x4, scoped, tag = 'scoped memory for tpu_custom_call.1']
    #allocation10 [shape = 'u8[16384]{0}', space=vmem, size = 0x4000, scoped, tag = 'input window, operand 4, single buffered']
    #allocation11 [shape = 'u8[8192]{0}', space=vmem, size = 0x2000, scoped, tag = 'output window, operand 0, single buffered']
    %14 = vsyncpa [#allocation3], 0
    %15 = vsyncpa [#allocation6], 0
    %16 = vsyncpa [#allocation9], 0
    %17 = vsyncpa [#allocation4], 0
    // Predicated region
    $region2: #{tpu_custom_call.1} parent=1 // pred_check
      _
    $region3: #{tpu_custom_call.1} parent=1 // pred_check_branch
      %19 = sbr.rel (0) target = $region5
    $region4: #{tpu_custom_call.1} parent=1 // pred_region
      %s21 = ssub.s32 256, 256
      %22 = vsyncadd [#allocation3], %s21
      %s23 = sshll.u32 [#allocation2], 4
      %s24 = int_to_ptr.vmem [resolvable:$true] %s23
      %29 = dma.hbm_to_vmem [thread:$0]  %s0, 256, %s24, [#allocation3], 128, 128, 8
    $region5: #{tpu_custom_call.1} parent=1 // pred_fallthru
      _
    // Predicated region
    $region6: #{tpu_custom_call.1} parent=1 // pred_check
      _
    $region7: #{tpu_custom_call.1} parent=1 // pred_check_branch
      %31 = sbr.rel (0) target = $region9
    $region8: #{tpu_custom_call.1} parent=1 // pred_region
      %s33 = ssub.s32 512, 512
      %34 = vsyncadd [#allocation6], %s33
      %s35 = sshll.u32 [#allocation5], 4
      %s36 = int_to_ptr.vmem [resolvable:$true] %s35
      %41 = dma.hbm_to_vmem [thread:$0]  %s1, 512, %s36, [#allocation6], 128, 128, 8
    $region9: #{tpu_custom_call.1} parent=1 // pred_fallthru
      _
    // Predicated region
    $region10: #{tpu_custom_call.1} parent=1 // pred_check
      _
    $region11: #{tpu_custom_call.1} parent=1 // pred_check_branch
      %43 = sbr.rel (0) target = $region13
    $region12: #{tpu_custom_call.1} parent=1 // pred_region
      %s45 = ssub.s32 512, 512
      %46 = vsyncadd [#allocation6], %s45
      %s47 = sshll.u32 [#allocation7], 4
      %s48 = int_to_ptr.vmem [resolvable:$true] %s47
      %53 = dma.hbm_to_vmem [thread:$0]  %s2, 512, %s48, [#allocation6], 128, 128, 8
    $region13: #{tpu_custom_call.1} parent=1 // pred_fallthru
      _
    // Predicated region
    $region14: #{tpu_custom_call.1} parent=1 // pred_check
      _
    $region15: #{tpu_custom_call.1} parent=1 // pred_check_branch
      %55 = sbr.rel (0) target = $region17
    $region16: #{tpu_custom_call.1} parent=1 // pred_region
      %s57 = ssub.s32 512, 512
      %58 = vsyncadd [#allocation9], %s57
      %s59 = sshll.u32 [#allocation8], 4
      %s60 = int_to_ptr.vmem [resolvable:$true] %s59
      %65 = dma.hbm_to_vmem [thread:$0]  %s3, 512, %s60, [#allocation9], 128, 128, 8
    $region17: #{tpu_custom_call.1} parent=1 // pred_fallthru
      _
    // Predicated region
    $region18: #{tpu_custom_call.1} parent=1 // pred_check
      _
    $region19: #{tpu_custom_call.1} parent=1 // pred_check_branch
      %67 = sbr.rel (0) target = $region21
    $region20: #{tpu_custom_call.1} parent=1 // pred_region
      %s69 = ssub.s32 512, 512
      %70 = vsyncadd [#allocation9], %s69
      %s71 = sshll.u32 [#allocation10], 4
      %s72 = int_to_ptr.vmem [resolvable:$true] %s71
      %77 = dma.hbm_to_vmem [thread:$0]  %s4, 512, %s72, [#allocation9], 128, 128, 8
    $region21: #{tpu_custom_call.1} parent=1 // pred_fallthru
      _
    // Predicated region
    $region22: #{tpu_custom_call.1} parent=1 // pred_check
      _
    $region23: #{tpu_custom_call.1} parent=1 // pred_check_branch
      %79 = sbr.rel (0) target = $region25
    $region24: #{tpu_custom_call.1} parent=1 // pred_region
      _
    $region25: #{tpu_custom_call.1} parent=1 // pred_fallthru
      _
    // Predicated region
    $region26: #{tpu_custom_call.1} parent=1 // pred_check
      _
    $region27: #{tpu_custom_call.1} parent=1 // pred_check_branch
      %81 = sbr.rel (0) target = $region29
    $region28: #{tpu_custom_call.1} parent=1 // pred_region
      _
    $region29: #{tpu_custom_call.1} parent=1 // pred_fallthru
      _
    // Predicated region
    $region30: #{tpu_custom_call.1} parent=1 // pred_check
      _
    $region31: #{tpu_custom_call.1} parent=1 // pred_check_branch
      %83 = sbr.rel (0) target = $region33
    $region32: #{tpu_custom_call.1} parent=1 // pred_region
      _
    $region33: #{tpu_custom_call.1} parent=1 // pred_fallthru
      _
    // Predicated region
    $region34: #{tpu_custom_call.1} parent=1 // pred_check
      _
    $region35: #{tpu_custom_call.1} parent=1 // pred_check_branch
      %85 = sbr.rel (0) target = $region37
    $region36: #{tpu_custom_call.1} parent=1 // pred_region
      _
    $region37: #{tpu_custom_call.1} parent=1 // pred_fallthru
      _
    // Predicated region
    $region38: #{tpu_custom_call.1} parent=1 // pred_check
      _
    $region39: #{tpu_custom_call.1} parent=1 // pred_check_branch
      %87 = sbr.rel (0) target = $region41
    $region40: #{tpu_custom_call.1} parent=1 // pred_region
      %88 = dma.done [#allocation3], 256
    $region41: #{tpu_custom_call.1} parent=1 // pred_fallthru
      _
    // Predicated region
    $region42: #{tpu_custom_call.1} parent=1 // pred_check
      _
    $region43: #{tpu_custom_call.1} parent=1 // pred_check_branch
      %90 = sbr.rel (0) target = $region45
    $region44: #{tpu_custom_call.1} parent=1 // pred_region
      %91 = dma.done [#allocation6], 512
    $region45: #{tpu_custom_call.1} parent=1 // pred_fallthru
      _
    // Predicated region
    $region46: #{tpu_custom_call.1} parent=1 // pred_check
      _
    $region47: #{tpu_custom_call.1} parent=1 // pred_check_branch
      %93 = sbr.rel (0) target = $region49
    $region48: #{tpu_custom_call.1} parent=1 // pred_region
      %94 = dma.done [#allocation6], 512
    $region49: #{tpu_custom_call.1} parent=1 // pred_fallthru
      _
    // Predicated region
    $region50: #{tpu_custom_call.1} parent=1 // pred_check
      _
    $region51: #{tpu_custom_call.1} parent=1 // pred_check_branch
      %96 = sbr.rel (0) target = $region53
    $region52: #{tpu_custom_call.1} parent=1 // pred_region
      %97 = dma.done [#allocation9], 512
    $region53: #{tpu_custom_call.1} parent=1 // pred_fallthru
      _
    // Predicated region
    $region54: #{tpu_custom_call.1} parent=1 // pred_check
      _
    $region55: #{tpu_custom_call.1} parent=1 // pred_check_branch
      %99 = sbr.rel (0) target = $region57
    $region56: #{tpu_custom_call.1} parent=1 // pred_region
      %100 = dma.done [#allocation9], 512
    $region57: #{tpu_custom_call.1} parent=1 // pred_fallthru
      _
    %v101 = vld [vmem:[#allocation2] sm:$0xff]
    %v102 = vld [vmem:[#allocation2 + $0x8] sm:$0xff]
    %v103 = vld [vmem:[#allocation5] sm:$0xff]
    %v104 = vld [vmem:[#allocation5 + $0x8] sm:$0xff]
    %v105 = vld [vmem:[#allocation5 + $0x10] sm:$0xff]
    %v106 = vld [vmem:[#allocation5 + $0x18] sm:$0xff]
    %v107 = vld [vmem:[#allocation7] sm:$0xff]
    %v108 = vld [vmem:[#allocation7 + $0x8] sm:$0xff]
    %v109 = vld [vmem:[#allocation7 + $0x10] sm:$0xff]
    %v110 = vld [vmem:[#allocation7 + $0x18] sm:$0xff]
    %v111 = vld [vmem:[#allocation8] sm:$0xff]
    %v112 = vld [vmem:[#allocation8 + $0x8] sm:$0xff]
    %v113 = vld [vmem:[#allocation8 + $0x10] sm:$0xff]
    %v114 = vld [vmem:[#allocation8 + $0x18] sm:$0xff]
    %v115 = vld [vmem:[#allocation10] sm:$0xff]
    %v116 = vld [vmem:[#allocation10 + $0x8] sm:$0xff]
    %v117 = vld [vmem:[#allocation10 + $0x10] sm:$0xff]
    %v118 = vld [vmem:[#allocation10 + $0x18] sm:$0xff]
    %v119 = vld [vmem:[%s5] sm:$0x1]
    %v120 = vld [vmem:[%s6] sm:$0x1]
    %v121 = vld [vmem:[%s7] sm:$0x1]
    %v122 = vld [vmem:[%s8] sm:$0x1]
    %v124 = vlaneseq
    %v125 = vshrl.u32 %v124, 7
    %v126 = vsub.s32 0, %v125
    %v127 = vrot.slane %v119, %v126
    %vm129 = vcmask 261120
    %v131 = vsel %vm129, %v101, 0
    %v134 = vsel %vm129, %v102, 0
    %136 = vmatprep.subr.mxu0 0.0
    %137 = vmatpush1.msra.mxu0 %v103
    %138 = vmatprep.subr.mxu0 0.0
    %139 = vmatpush1.msra.mxu0 %v104
    %140 = vmatprep.subr.mxu0 0.0
    %141 = vmatpush1.msra.mxu0 %v105
    %142 = vmatprep.subr.mxu0 0.0
    %143 = vmatpush1.msra.mxu0 %v106
    %144 = vmatprep.subr.mxu0 0.0
    %145 = vmatpush1.msra.mxu0 0.0
    %146 = vmatprep.subr.mxu0 0.0
    %147 = vmatpush1.msra.mxu0 0.0
    %148 = vmatprep.subr.mxu0 0.0
    %149 = vmatpush1.msra.mxu0 0.0
    %150 = vmatprep.subr.mxu0 0.0
    %151 = vmatpush1.msra.mxu0 0.0
    %152 = vmatprep.subr.mxu0 0.0
    %153 = vmatpush1.msra.mxu0 0.0
    %154 = vmatprep.subr.mxu0 0.0
    %155 = vmatpush1.msra.mxu0 0.0
    %156 = vmatprep.subr.mxu0 0.0
    %157 = vmatpush1.msra.mxu0 0.0
    %158 = vmatprep.subr.mxu0 0.0
    %159 = vmatpush1.msra.mxu0 0.0
    %160 = vmatprep.subr.mxu0 0.0
    %161 = vmatpush1.msra.mxu0 0.0
    %162 = vmatprep.subr.mxu0 0.0
    %163 = vmatpush1.msra.mxu0 0.0
    %164 = vmatprep.subr.mxu0 0.0
    %165 = vmatpush1.msra.mxu0 0.0
    %166 = vmatprep.subr.mxu0 0.0
    %167 = vmatpush1.msra.mxu0 0.0
    %168 = vmatprep.subr.mxu0 0.0
    %169 = vmatpush1.msra.mxu0 0.0
    %170 = vmatprep.subr.mxu0 0.0
    %171 = vmatpush1.msra.mxu0 0.0
    %172 = vmatprep.subr.mxu0 0.0
    %173 = vmatpush1.msra.mxu0 0.0
    %174 = vmatprep.subr.mxu0 0.0
    %175 = vmatpush1.msra.mxu0 0.0
    %176 = vmatprep.subr.mxu0 0.0
    %177 = vmatpush1.msra.mxu0 0.0
    %178 = vmatprep.subr.mxu0 0.0
    %179 = vmatpush1.msra.mxu0 0.0
    %180 = vmatprep.subr.mxu0 0.0
    %181 = vmatpush1.msra.mxu0 0.0
    %182 = vmatprep.subr.mxu0 0.0
    %183 = vmatpush1.msra.mxu0 0.0
    %184 = vmatprep.subr.mxu0 0.0
    %185 = vmatpush1.msra.mxu0 0.0
    %186 = vmatprep.subr.mxu0 0.0
    %187 = vmatpush1.msra.mxu0 0.0
    %188 = vmatprep.subr.mxu0 0.0
    %189 = vmatpush1.msra.mxu0 0.0
    %190 = vmatprep.subr.mxu0 0.0
    %191 = vmatpush1.msra.mxu0 0.0
    %192 = vmatprep.subr.mxu0 0.0
    %193 = vmatpush1.msra.mxu0 0.0
    %194 = vmatprep.subr.mxu0 0.0
    %195 = vmatpush1.msra.mxu0 0.0
    %196 = vmatprep.subr.mxu0 0.0
    %197 = vmatpush1.msra.mxu0 0.0
    %198 = vmatprep.subr.mxu0 0.0
    %199 = vmatpush1.msra.mxu0 0.0
    %200 = vmatprep.mubr.f32.mxu0 0.0
    %201 = vmatmul.mubr.f32.gmra.mrb[0].mxu0 %v131
    %v202 = vpop.f32.mrb[0].mxu0
    %v203 = vadd.f32 %v127, %v202
    %v204 = vpop.f32.mrb[0].mxu0
    %205 = vmatprep.mubr.f32.mxu0 0.0
    %206 = vmatmul.mubr.f32.gmra.mrb[0].mxu0 %v134
    %v207 = vpop.f32.mrb[0].mxu0
    %v208 = vadd.f32 %v127, %v207
    %v209 = vpop.f32.mrb[0].mxu0
    %210 = vdwg.mxu0
    %v212 = vlaneseq
    %v213 = vshrl.u32 %v212, 7
    %v214 = vsub.s32 0, %v213
    %v215 = vrot.slane %v120, %v214
    %217 = vmatprep.subr.mxu0 0.0
    %218 = vmatpush1.msra.mxu0 %v107
    %219 = vmatprep.subr.mxu0 0.0
    %220 = vmatpush1.msra.mxu0 %v108
    %221 = vmatprep.subr.mxu0 0.0
    %222 = vmatpush1.msra.mxu0 %v109
    %223 = vmatprep.subr.mxu0 0.0
    %224 = vmatpush1.msra.mxu0 %v110
    %225 = vmatprep.subr.mxu0 0.0
    %226 = vmatpush1.msra.mxu0 0.0
    %227 = vmatprep.subr.mxu0 0.0
    %228 = vmatpush1.msra.mxu0 0.0
    %229 = vmatprep.subr.mxu0 0.0
    %230 = vmatpush1.msra.mxu0 0.0
    %231 = vmatprep.subr.mxu0 0.0
    %232 = vmatpush1.msra.mxu0 0.0
    %233 = vmatprep.subr.mxu0 0.0
    %234 = vmatpush1.msra.mxu0 0.0
    %235 = vmatprep.subr.mxu0 0.0
    %236 = vmatpush1.msra.mxu0 0.0
    %237 = vmatprep.subr.mxu0 0.0
    %238 = vmatpush1.msra.mxu0 0.0
    %239 = vmatprep.subr.mxu0 0.0
    %240 = vmatpush1.msra.mxu0 0.0
    %241 = vmatprep.subr.mxu0 0.0
    %242 = vmatpush1.msra.mxu0 0.0
    %243 = vmatprep.subr.mxu0 0.0
    %244 = vmatpush1.msra.mxu0 0.0
    %245 = vmatprep.subr.mxu0 0.0
    %246 = vmatpush1.msra.mxu0 0.0
    %247 = vmatprep.subr.mxu0 0.0
    %248 = vmatpush1.msra.mxu0 0.0
    %249 = vmatprep.subr.mxu0 0.0
    %250 = vmatpush1.msra.mxu0 0.0
    %251 = vmatprep.subr.mxu0 0.0
    %252 = vmatpush1.msra.mxu0 0.0
    %253 = vmatprep.subr.mxu0 0.0
    %254 = vmatpush1.msra.mxu0 0.0
    %255 = vmatprep.subr.mxu0 0.0
    %256 = vmatpush1.msra.mxu0 0.0
    %257 = vmatprep.subr.mxu0 0.0
    %258 = vmatpush1.msra.mxu0 0.0
    %259 = vmatprep.subr.mxu0 0.0
    %260 = vmatpush1.msra.mxu0 0.0
    %261 = vmatprep.subr.mxu0 0.0
    %262 = vmatpush1.msra.mxu0 0.0
    %263 = vmatprep.subr.mxu0 0.0
    %264 = vmatpush1.msra.mxu0 0.0
    %265 = vmatprep.subr.mxu0 0.0
    %266 = vmatpush1.msra.mxu0 0.0
    %267 = vmatprep.subr.mxu0 0.0
    %268 = vmatpush1.msra.mxu0 0.0
    %269 = vmatprep.subr.mxu0 0.0
    %270 = vmatpush1.msra.mxu0 0.0
    %271 = vmatprep.subr.mxu0 0.0
    %272 = vmatpush1.msra.mxu0 0.0
    %273 = vmatprep.subr.mxu0 0.0
    %274 = vmatpush1.msra.mxu0 0.0
    %275 = vmatprep.subr.mxu0 0.0
    %276 = vmatpush1.msra.mxu0 0.0
    %277 = vmatprep.subr.mxu0 0.0
    %278 = vmatpush1.msra.mxu0 0.0
    %279 = vmatprep.subr.mxu0 0.0
    %280 = vmatpush1.msra.mxu0 0.0
    %281 = vmatprep.mubr.f32.mxu0 0.0
    %282 = vmatmul.mubr.f32.gmra.mrb[0].mxu0 %v131
    %v283 = vpop.f32.mrb[0].mxu0
    %v284 = vadd.f32 %v215, %v283
    %v285 = vpop.f32.mrb[0].mxu0
    %286 = vmatprep.mubr.f32.mxu0 0.0
    %287 = vmatmul.mubr.f32.gmra.mrb[0].mxu0 %v134
    %v288 = vpop.f32.mrb[0].mxu0
    %v289 = vadd.f32 %v215, %v288
    %v290 = vpop.f32.mrb[0].mxu0
    %291 = vdwg.mxu0
    %v293 = vlaneseq
    %v294 = vshrl.u32 %v293, 7
    %v295 = vsub.s32 0, %v294
    %v296 = vrot.slane %v121, %v295
    %298 = vmatprep.subr.mxu0 0.0
    %299 = vmatpush1.msra.mxu0 %v111
    %300 = vmatprep.subr.mxu0 0.0
    %301 = vmatpush1.msra.mxu0 %v112
    %302 = vmatprep.subr.mxu0 0.0
    %303 = vmatpush1.msra.mxu0 %v113
    %304 = vmatprep.subr.mxu0 0.0
    %305 = vmatpush1.msra.mxu0 %v114
    %306 = vmatprep.subr.mxu0 0.0
    %307 = vmatpush1.msra.mxu0 0.0
    %308 = vmatprep.subr.mxu0 0.0
    %309 = vmatpush1.msra.mxu0 0.0
    %310 = vmatprep.subr.mxu0 0.0
    %311 = vmatpush1.msra.mxu0 0.0
    %312 = vmatprep.subr.mxu0 0.0
    %313 = vmatpush1.msra.mxu0 0.0
    %314 = vmatprep.subr.mxu0 0.0
    %315 = vmatpush1.msra.mxu0 0.0
    %316 = vmatprep.subr.mxu0 0.0
    %317 = vmatpush1.msra.mxu0 0.0
    %318 = vmatprep.subr.mxu0 0.0
    %319 = vmatpush1.msra.mxu0 0.0
    %320 = vmatprep.subr.mxu0 0.0
    %321 = vmatpush1.msra.mxu0 0.0
    %322 = vmatprep.subr.mxu0 0.0
    %323 = vmatpush1.msra.mxu0 0.0
    %324 = vmatprep.subr.mxu0 0.0
    %325 = vmatpush1.msra.mxu0 0.0
    %326 = vmatprep.subr.mxu0 0.0
    %327 = vmatpush1.msra.mxu0 0.0
    %328 = vmatprep.subr.mxu0 0.0
    %329 = vmatpush1.msra.mxu0 0.0
    %330 = vmatprep.subr.mxu0 0.0
    %331 = vmatpush1.msra.mxu0 0.0
    %332 = vmatprep.subr.mxu0 0.0
    %333 = vmatpush1.msra.mxu0 0.0
    %334 = vmatprep.subr.mxu0 0.0
    %335 = vmatpush1.msra.mxu0 0.0
    %336 = vmatprep.subr.mxu0 0.0
    %337 = vmatpush1.msra.mxu0 0.0
    %338 = vmatprep.subr.mxu0 0.0
    %339 = vmatpush1.msra.mxu0 0.0
    %340 = vmatprep.subr.mxu0 0.0
    %341 = vmatpush1.msra.mxu0 0.0
    %342 = vmatprep.subr.mxu0 0.0
    %343 = vmatpush1.msra.mxu0 0.0
    %344 = vmatprep.subr.mxu0 0.0
    %345 = vmatpush1.msra.mxu0 0.0
    %346 = vmatprep.subr.mxu0 0.0
    %347 = vmatpush1.msra.mxu0 0.0
    %348 = vmatprep.subr.mxu0 0.0
    %349 = vmatpush1.msra.mxu0 0.0
    %350 = vmatprep.subr.mxu0 0.0
    %351 = vmatpush1.msra.mxu0 0.0
    %352 = vmatprep.subr.mxu0 0.0
    %353 = vmatpush1.msra.mxu0 0.0
    %354 = vmatprep.subr.mxu0 0.0
    %355 = vmatpush1.msra.mxu0 0.0
    %356 = vmatprep.subr.mxu0 0.0
    %357 = vmatpush1.msra.mxu0 0.0
    %358 = vmatprep.subr.mxu0 0.0
    %359 = vmatpush1.msra.mxu0 0.0
    %360 = vmatprep.subr.mxu0 0.0
    %361 = vmatpush1.msra.mxu0 0.0
    %362 = vmatprep.mubr.f32.mxu0 0.0
    %363 = vmatmul.mubr.f32.gmra.mrb[0].mxu0 %v131
    %v364 = vpop.f32.mrb[0].mxu0
    %v365 = vadd.f32 %v296, %v364
    %v366 = vpop.f32.mrb[0].mxu0
    %367 = vmatprep.mubr.f32.mxu0 0.0
    %368 = vmatmul.mubr.f32.gmra.mrb[0].mxu0 %v134
    %v369 = vpop.f32.mrb[0].mxu0
    %v370 = vadd.f32 %v296, %v369
    %v371 = vpop.f32.mrb[0].mxu0
    %372 = vdwg.mxu0
    %v374 = vsel %vm129, %v203, 0
    %v377 = vsel %vm129, %v284, 0
    %379 = vmatprep.subr.mxu0 0.0
    %380 = vmatpush1.xpose.msra.mxu0 %v377
    %381 = vmatprep.subr.mxu0 0.0
    %382 = vmatpush1.xpose.msra.mxu0 0.0
    %383 = vmatprep.subr.mxu0 0.0
    %384 = vmatpush1.xpose.msra.mxu0 0.0
    %385 = vmatprep.subr.mxu0 0.0
    %386 = vmatpush1.xpose.msra.mxu0 0.0
    %387 = vmatprep.subr.mxu0 0.0
    %388 = vmatpush1.xpose.msra.mxu0 0.0
    %389 = vmatprep.subr.mxu0 0.0
    %390 = vmatpush1.xpose.msra.mxu0 0.0
    %391 = vmatprep.subr.mxu0 0.0
    %392 = vmatpush1.xpose.msra.mxu0 0.0
    %393 = vmatprep.subr.mxu0 0.0
    %394 = vmatpush1.xpose.msra.mxu0 0.0
    %395 = vmatprep.subr.mxu0 0.0
    %396 = vmatpush1.xpose.msra.mxu0 0.0
    %397 = vmatprep.subr.mxu0 0.0
    %398 = vmatpush1.xpose.msra.mxu0 0.0
    %399 = vmatprep.subr.mxu0 0.0
    %400 = vmatpush1.xpose.msra.mxu0 0.0
    %401 = vmatprep.subr.mxu0 0.0
    %402 = vmatpush1.xpose.msra.mxu0 0.0
    %403 = vmatprep.subr.mxu0 0.0
    %404 = vmatpush1.xpose.msra.mxu0 0.0
    %405 = vmatprep.subr.mxu0 0.0
    %406 = vmatpush1.xpose.msra.mxu0 0.0
    %407 = vmatprep.subr.mxu0 0.0
    %408 = vmatpush1.xpose.msra.mxu0 0.0
    %409 = vmatprep.subr.mxu0 0.0
    %410 = vmatpush1.xpose.msra.mxu0 0.0
    %411 = vmatprep.subr.mxu0 0.0
    %412 = vmatpush1.xpose.msra.mxu0 0.0
    %413 = vmatprep.subr.mxu0 0.0
    %414 = vmatpush1.xpose.msra.mxu0 0.0
    %415 = vmatprep.subr.mxu0 0.0
    %416 = vmatpush1.xpose.msra.mxu0 0.0
    %417 = vmatprep.subr.mxu0 0.0
    %418 = vmatpush1.xpose.msra.mxu0 0.0
    %419 = vmatprep.subr.mxu0 0.0
    %420 = vmatpush1.xpose.msra.mxu0 0.0
    %421 = vmatprep.subr.mxu0 0.0
    %422 = vmatpush1.xpose.msra.mxu0 0.0
    %423 = vmatprep.subr.mxu0 0.0
    %424 = vmatpush1.xpose.msra.mxu0 0.0
    %425 = vmatprep.subr.mxu0 0.0
    %426 = vmatpush1.xpose.msra.mxu0 0.0
    %427 = vmatprep.subr.mxu0 0.0
    %428 = vmatpush1.xpose.msra.mxu0 0.0
    %429 = vmatprep.subr.mxu0 0.0
    %430 = vmatpush1.xpose.msra.mxu0 0.0
    %431 = vmatprep.subr.mxu0 0.0
    %432 = vmatpush1.xpose.msra.mxu0 0.0
    %433 = vmatprep.subr.mxu0 0.0
    %434 = vmatpush1.xpose.msra.mxu0 0.0
    %435 = vmatprep.subr.mxu0 0.0
    %436 = vmatpush1.xpose.msra.mxu0 0.0
    %437 = vmatprep.subr.mxu0 0.0
    %438 = vmatpush1.xpose.msra.mxu0 0.0
    %439 = vmatprep.subr.mxu0 0.0
    %440 = vmatpush1.xpose.msra.mxu0 0.0
    %441 = vmatprep.subr.mxu0 0.0
    %442 = vmatpush1.xpose.msra.mxu0 0.0
    %443 = vmatprep.mubr.f32.mxu0 0.0
    %444 = vmatmul.mubr.f32.gmra.mrb[0].mxu0 %v374
    %v445 = vpop.f32.mrb[0].mxu0
    %v446 = vadd.f32 0.0, %v445
    %v447 = vpop.f32.mrb[0].mxu0
    %448 = vdwg.mxu0
    %v450 = vsel %vm129, %v208, 0
    %v453 = vsel %vm129, %v289, 0
    %455 = vmatprep.subr.mxu0 0.0
    %456 = vmatpush1.xpose.msra.mxu0 %v453
    %457 = vmatprep.subr.mxu0 0.0
    %458 = vmatpush1.xpose.msra.mxu0 0.0
    %459 = vmatprep.subr.mxu0 0.0
    %460 = vmatpush1.xpose.msra.mxu0 0.0
    %461 = vmatprep.subr.mxu0 0.0
    %462 = vmatpush1.xpose.msra.mxu0 0.0
    %463 = vmatprep.subr.mxu0 0.0
    %464 = vmatpush1.xpose.msra.mxu0 0.0
    %465 = vmatprep.subr.mxu0 0.0
    %466 = vmatpush1.xpose.msra.mxu0 0.0
    %467 = vmatprep.subr.mxu0 0.0
    %468 = vmatpush1.xpose.msra.mxu0 0.0
    %469 = vmatprep.subr.mxu0 0.0
    %470 = vmatpush1.xpose.msra.mxu0 0.0
    %471 = vmatprep.subr.mxu0 0.0
    %472 = vmatpush1.xpose.msra.mxu0 0.0
    %473 = vmatprep.subr.mxu0 0.0
    %474 = vmatpush1.xpose.msra.mxu0 0.0
    %475 = vmatprep.subr.mxu0 0.0
    %476 = vmatpush1.xpose.msra.mxu0 0.0
    %477 = vmatprep.subr.mxu0 0.0
    %478 = vmatpush1.xpose.msra.mxu0 0.0
    %479 = vmatprep.subr.mxu0 0.0
    %480 = vmatpush1.xpose.msra.mxu0 0.0
    %481 = vmatprep.subr.mxu0 0.0
    %482 = vmatpush1.xpose.msra.mxu0 0.0
    %483 = vmatprep.subr.mxu0 0.0
    %484 = vmatpush1.xpose.msra.mxu0 0.0
    %485 = vmatprep.subr.mxu0 0.0
    %486 = vmatpush1.xpose.msra.mxu0 0.0
    %487 = vmatprep.subr.mxu0 0.0
    %488 = vmatpush1.xpose.msra.mxu0 0.0
    %489 = vmatprep.subr.mxu0 0.0
    %490 = vmatpush1.xpose.msra.mxu0 0.0
    %491 = vmatprep.subr.mxu0 0.0
    %492 = vmatpush1.xpose.msra.mxu0 0.0
    %493 = vmatprep.subr.mxu0 0.0
    %494 = vmatpush1.xpose.msra.mxu0 0.0
    %495 = vmatprep.subr.mxu0 0.0
    %496 = vmatpush1.xpose.msra.mxu0 0.0
    %497 = vmatprep.subr.mxu0 0.0
    %498 = vmatpush1.xpose.msra.mxu0 0.0
    %499 = vmatprep.subr.mxu0 0.0
    %500 = vmatpush1.xpose.msra.mxu0 0.0
    %501 = vmatprep.subr.mxu0 0.0
    %502 = vmatpush1.xpose.msra.mxu0 0.0
    %503 = vmatprep.subr.mxu0 0.0
    %504 = vmatpush1.xpose.msra.mxu0 0.0
    %505 = vmatprep.subr.mxu0 0.0
    %506 = vmatpush1.xpose.msra.mxu0 0.0
    %507 = vmatprep.subr.mxu0 0.0
    %508 = vmatpush1.xpose.msra.mxu0 0.0
    %509 = vmatprep.subr.mxu0 0.0
    %510 = vmatpush1.xpose.msra.mxu0 0.0
    %511 = vmatprep.subr.mxu0 0.0
    %512 = vmatpush1.xpose.msra.mxu0 0.0
    %513 = vmatprep.subr.mxu0 0.0
    %514 = vmatpush1.xpose.msra.mxu0 0.0
    %515 = vmatprep.subr.mxu0 0.0
    %516 = vmatpush1.xpose.msra.mxu0 0.0
    %517 = vmatprep.subr.mxu0 0.0
    %518 = vmatpush1.xpose.msra.mxu0 0.0
    %519 = vmatprep.mubr.f32.mxu0 0.0
    %520 = vmatmul.mubr.f32.gmra.mrb[0].mxu0 %v450
    %v521 = vpop.f32.mrb[0].mxu0
    %v522 = vadd.f32 0.0, %v521
    %v523 = vpop.f32.mrb[0].mxu0
    %524 = vdwg.mxu0
    %vm525 = vcmask 64512
    %v526 = vsel %vm525, %v446, -inf
    %527 = vmax.xlane.f32.xlu0 %v526
    %v528 = vpop.xlane.xlu0 %527
    %v529 = vsel %vm525, %v522, -inf
    %530 = vmax.xlane.f32.xlu0 %v529
    %v531 = vpop.xlane.xlu0 %530
    %v532 = vsub.f32 %v446, %v528
    %v533 = vsub.f32 %v522, %v531
    %v534 = vmul.f32 %v532, 1.442695
    %v535 = vpow.pop %v534
    %v536 = vmul.f32 %v533, 1.442695
    %v537 = vpow.pop %v536
    %v538 = vsel %vm525, %v535, 0.0
    %539 = vadd.xlane.f32.xlu0 %v538
    %v540 = vpop.xlane.xlu0 %539
    %v541 = vsel %vm525, %v537, 0.0
    %542 = vadd.xlane.f32.xlu0 %v541
    %v543 = vpop.xlane.xlu0 %542
    %v545 = vsel %vm525, %v535, 0
    %547 = vmatprep.subr.mxu0 0.0
    %548 = vmatpush1.msra.mxu0 %v365
    %549 = vmatprep.subr.mxu0 0.0
    %550 = vmatpush1.msra.mxu0 0.0
    %551 = vmatprep.subr.mxu0 0.0
    %552 = vmatpush1.msra.mxu0 0.0
    %553 = vmatprep.subr.mxu0 0.0
    %554 = vmatpush1.msra.mxu0 0.0
    %555 = vmatprep.subr.mxu0 0.0
    %556 = vmatpush1.msra.mxu0 0.0
    %557 = vmatprep.subr.mxu0 0.0
    %558 = vmatpush1.msra.mxu0 0.0
    %559 = vmatprep.subr.mxu0 0.0
    %560 = vmatpush1.msra.mxu0 0.0
    %561 = vmatprep.subr.mxu0 0.0
    %562 = vmatpush1.msra.mxu0 0.0
    %563 = vmatprep.subr.mxu0 0.0
    %564 = vmatpush1.msra.mxu0 0.0
    %565 = vmatprep.subr.mxu0 0.0
    %566 = vmatpush1.msra.mxu0 0.0
    %567 = vmatprep.subr.mxu0 0.0
    %568 = vmatpush1.msra.mxu0 0.0
    %569 = vmatprep.subr.mxu0 0.0
    %570 = vmatpush1.msra.mxu0 0.0
    %571 = vmatprep.subr.mxu0 0.0
    %572 = vmatpush1.msra.mxu0 0.0
    %573 = vmatprep.subr.mxu0 0.0
    %574 = vmatpush1.msra.mxu0 0.0
    %575 = vmatprep.subr.mxu0 0.0
    %576 = vmatpush1.msra.mxu0 0.0
    %577 = vmatprep.subr.mxu0 0.0
    %578 = vmatpush1.msra.mxu0 0.0
    %579 = vmatprep.subr.mxu0 0.0
    %580 = vmatpush1.msra.mxu0 0.0
    %581 = vmatprep.subr.mxu0 0.0
    %582 = vmatpush1.msra.mxu0 0.0
    %583 = vmatprep.subr.mxu0 0.0
    %584 = vmatpush1.msra.mxu0 0.0
    %585 = vmatprep.subr.mxu0 0.0
    %586 = vmatpush1.msra.mxu0 0.0
    %587 = vmatprep.subr.mxu0 0.0
    %588 = vmatpush1.msra.mxu0 0.0
    %589 = vmatprep.subr.mxu0 0.0
    %590 = vmatpush1.msra.mxu0 0.0
    %591 = vmatprep.subr.mxu0 0.0
    %592 = vmatpush1.msra.mxu0 0.0
    %593 = vmatprep.subr.mxu0 0.0
    %594 = vmatpush1.msra.mxu0 0.0
    %595 = vmatprep.subr.mxu0 0.0
    %596 = vmatpush1.msra.mxu0 0.0
    %597 = vmatprep.subr.mxu0 0.0
    %598 = vmatpush1.msra.mxu0 0.0
    %599 = vmatprep.subr.mxu0 0.0
    %600 = vmatpush1.msra.mxu0 0.0
    %601 = vmatprep.subr.mxu0 0.0
    %602 = vmatpush1.msra.mxu0 0.0
    %603 = vmatprep.subr.mxu0 0.0
    %604 = vmatpush1.msra.mxu0 0.0
    %605 = vmatprep.subr.mxu0 0.0
    %606 = vmatpush1.msra.mxu0 0.0
    %607 = vmatprep.subr.mxu0 0.0
    %608 = vmatpush1.msra.mxu0 0.0
    %609 = vmatprep.subr.mxu0 0.0
    %610 = vmatpush1.msra.mxu0 0.0
    %611 = vmatprep.mubr.f32.mxu0 0.0
    %612 = vmatmul.mubr.f32.gmra.mrb[0].mxu0 %v545
    %v613 = vpop.f32.mrb[0].mxu0
    %v614 = vadd.f32 0.0, %v613
    %v615 = vpop.f32.mrb[0].mxu0
    %616 = vdwg.mxu0
    %v618 = vsel %vm525, %v537, 0
    %620 = vmatprep.subr.mxu0 0.0
    %621 = vmatpush1.msra.mxu0 %v370
    %622 = vmatprep.subr.mxu0 0.0
    %623 = vmatpush1.msra.mxu0 0.0
    %624 = vmatprep.subr.mxu0 0.0
    %625 = vmatpush1.msra.mxu0 0.0
    %626 = vmatprep.subr.mxu0 0.0
    %627 = vmatpush1.msra.mxu0 0.0
    %628 = vmatprep.subr.mxu0 0.0
    %629 = vmatpush1.msra.mxu0 0.0
    %630 = vmatprep.subr.mxu0 0.0
    %631 = vmatpush1.msra.mxu0 0.0
    %632 = vmatprep.subr.mxu0 0.0
    %633 = vmatpush1.msra.mxu0 0.0
    %634 = vmatprep.subr.mxu0 0.0
    %635 = vmatpush1.msra.mxu0 0.0
    %636 = vmatprep.subr.mxu0 0.0
    %637 = vmatpush1.msra.mxu0 0.0
    %638 = vmatprep.subr.mxu0 0.0
    %639 = vmatpush1.msra.mxu0 0.0
    %640 = vmatprep.subr.mxu0 0.0
    %641 = vmatpush1.msra.mxu0 0.0
    %642 = vmatprep.subr.mxu0 0.0
    %643 = vmatpush1.msra.mxu0 0.0
    %644 = vmatprep.subr.mxu0 0.0
    %645 = vmatpush1.msra.mxu0 0.0
    %646 = vmatprep.subr.mxu0 0.0
    %647 = vmatpush1.msra.mxu0 0.0
    %648 = vmatprep.subr.mxu0 0.0
    %649 = vmatpush1.msra.mxu0 0.0
    %650 = vmatprep.subr.mxu0 0.0
    %651 = vmatpush1.msra.mxu0 0.0
    %652 = vmatprep.subr.mxu0 0.0
    %653 = vmatpush1.msra.mxu0 0.0
    %654 = vmatprep.subr.mxu0 0.0
    %655 = vmatpush1.msra.mxu0 0.0
    %656 = vmatprep.subr.mxu0 0.0
    %657 = vmatpush1.msra.mxu0 0.0
    %658 = vmatprep.subr.mxu0 0.0
    %659 = vmatpush1.msra.mxu0 0.0
    %660 = vmatprep.subr.mxu0 0.0
    %661 = vmatpush1.msra.mxu0 0.0
    %662 = vmatprep.subr.mxu0 0.0
    %663 = vmatpush1.msra.mxu0 0.0
    %664 = vmatprep.subr.mxu0 0.0
    %665 = vmatpush1.msra.mxu0 0.0
    %666 = vmatprep.subr.mxu0 0.0
    %667 = vmatpush1.msra.mxu0 0.0
    %668 = vmatprep.subr.mxu0 0.0
    %669 = vmatpush1.msra.mxu0 0.0
    %670 = vmatprep.subr.mxu0 0.0
    %671 = vmatpush1.msra.mxu0 0.0
    %672 = vmatprep.subr.mxu0 0.0
    %673 = vmatpush1.msra.mxu0 0.0
    %674 = vmatprep.subr.mxu0 0.0
    %675 = vmatpush1.msra.mxu0 0.0
    %676 = vmatprep.subr.mxu0 0.0
    %677 = vmatpush1.msra.mxu0 0.0
    %678 = vmatprep.subr.mxu0 0.0
    %679 = vmatpush1.msra.mxu0 0.0
    %680 = vmatprep.subr.mxu0 0.0
    %681 = vmatpush1.msra.mxu0 0.0
    %682 = vmatprep.subr.mxu0 0.0
    %683 = vmatpush1.msra.mxu0 0.0
    %684 = vmatprep.mubr.f32.mxu0 0.0
    %685 = vmatmul.mubr.f32.gmra.mrb[0].mxu0 %v618
    %v686 = vpop.f32.mrb[0].mxu0
    %v687 = vadd.f32 0.0, %v686
    %v688 = vpop.f32.mrb[0].mxu0
    %689 = vdwg.mxu0
    %v690 = vrcp.pop %v540
    %v691 = vrcp.pop %v543
    %v692 = vmul.f32 %v614, %v690
    %v693 = vmul.f32 %v687, %v691
    %v695 = vlaneseq
    %v696 = vshrl.u32 %v695, 7
    %v697 = vsub.s32 0, %v696
    %v698 = vrot.slane %v122, %v697
    %v701 = vsel %vm129, %v692, 0
    %v704 = vsel %vm129, %v693, 0
    %706 = vmatprep.subr.mxu0 0.0
    %707 = vmatpush1.msra.mxu0 %v115
    %708 = vmatprep.subr.mxu0 0.0
    %709 = vmatpush1.msra.mxu0 %v116
    %710 = vmatprep.subr.mxu0 0.0
    %711 = vmatpush1.msra.mxu0 %v117
    %712 = vmatprep.subr.mxu0 0.0
    %713 = vmatpush1.msra.mxu0 %v118
    %714 = vmatprep.subr.mxu0 0.0
    %715 = vmatpush1.msra.mxu0 0.0
    %716 = vmatprep.subr.mxu0 0.0
    %717 = vmatpush1.msra.mxu0 0.0
    %718 = vmatprep.subr.mxu0 0.0
    %719 = vmatpush1.msra.mxu0 0.0
    %720 = vmatprep.subr.mxu0 0.0
    %721 = vmatpush1.msra.mxu0 0.0
    %722 = vmatprep.subr.mxu0 0.0
    %723 = vmatpush1.msra.mxu0 0.0
    %724 = vmatprep.subr.mxu0 0.0
    %725 = vmatpush1.msra.mxu0 0.0
    %726 = vmatprep.subr.mxu0 0.0
    %727 = vmatpush1.msra.mxu0 0.0
    %728 = vmatprep.subr.mxu0 0.0
    %729 = vmatpush1.msra.mxu0 0.0
    %730 = vmatprep.subr.mxu0 0.0
    %731 = vmatpush1.msra.mxu0 0.0
    %732 = vmatprep.subr.mxu0 0.0
    %733 = vmatpush1.msra.mxu0 0.0
    %734 = vmatprep.subr.mxu0 0.0
    %735 = vmatpush1.msra.mxu0 0.0
    %736 = vmatprep.subr.mxu0 0.0
    %737 = vmatpush1.msra.mxu0 0.0
    %738 = vmatprep.subr.mxu0 0.0
    %739 = vmatpush1.msra.mxu0 0.0
    %740 = vmatprep.subr.mxu0 0.0
    %741 = vmatpush1.msra.mxu0 0.0
    %742 = vmatprep.subr.mxu0 0.0
    %743 = vmatpush1.msra.mxu0 0.0
    %744 = vmatprep.subr.mxu0 0.0
    %745 = vmatpush1.msra.mxu0 0.0
    %746 = vmatprep.subr.mxu0 0.0
    %747 = vmatpush1.msra.mxu0 0.0
    %748 = vmatprep.subr.mxu0 0.0
    %749 = vmatpush1.msra.mxu0 0.0
    %750 = vmatprep.subr.mxu0 0.0
    %751 = vmatpush1.msra.mxu0 0.0
    %752 = vmatprep.subr.mxu0 0.0
    %753 = vmatpush1.msra.mxu0 0.0
    %754 = vmatprep.subr.mxu0 0.0
    %755 = vmatpush1.msra.mxu0 0.0
    %756 = vmatprep.subr.mxu0 0.0
    %757 = vmatpush1.msra.mxu0 0.0
    %758 = vmatprep.subr.mxu0 0.0
    %759 = vmatpush1.msra.mxu0 0.0
    %760 = vmatprep.subr.mxu0 0.0
    %761 = vmatpush1.msra.mxu0 0.0
    %762 = vmatprep.subr.mxu0 0.0
    %763 = vmatpush1.msra.mxu0 0.0
    %764 = vmatprep.subr.mxu0 0.0
    %765 = vmatpush1.msra.mxu0 0.0
    %766 = vmatprep.subr.mxu0 0.0
    %767 = vmatpush1.msra.mxu0 0.0
    %768 = vmatprep.subr.mxu0 0.0
    %769 = vmatpush1.msra.mxu0 0.0
    %770 = vmatprep.mubr.f32.mxu0 0.0
    %771 = vmatmul.mubr.f32.gmra.mrb[0].mxu0 %v701
    %v772 = vpop.f32.mrb[0].mxu0
    %v773 = vadd.f32 %v698, %v772
    %v774 = vpop.f32.mrb[0].mxu0
    %775 = vmatprep.mubr.f32.mxu0 0.0
    %776 = vmatmul.mubr.f32.gmra.mrb[0].mxu0 %v704
    %v777 = vpop.f32.mrb[0].mxu0
    %v778 = vadd.f32 %v698, %v777
    %v779 = vpop.f32.mrb[0].mxu0
    %780 = vdwg.mxu0
    %781 = vst.msk [vmem:[#allocation11] sm:$0xff] %vm129, %v773
    %782 = vst.msk [vmem:[#allocation11 + $0x8] sm:$0xff] %vm129, %v778
    // Predicated region
    $region58: #{tpu_custom_call.1} parent=1 // pred_check
      _
    $region59: #{tpu_custom_call.1} parent=1 // pred_check_branch
      %784 = sbr.rel (0) target = $region61
    $region60: #{tpu_custom_call.1} parent=1 // pred_region
      %s786 = ssub.s32 256, 256
      %787 = vsyncadd [#allocation4], %s786
      %s788 = sshll.u32 [#allocation11], 4
      %s789 = int_to_ptr.vmem [resolvable:$true] %s788
      %794 = dma.vmem_to_hbm [thread:$0]  %s789, 256, %s9, [#allocation4], 128, 128, 8
    $region61: #{tpu_custom_call.1} parent=1 // pred_fallthru
      _
    // Predicated region
    $region62: #{tpu_custom_call.1} parent=1 // pred_check
      _
    $region63: #{tpu_custom_call.1} parent=1 // pred_check_branch
      %796 = sbr.rel (0) target = $region65
    $region64: #{tpu_custom_call.1} parent=1 // pred_region
      %797 = dma.done [#allocation4], 256
    $region65: #{tpu_custom_call.1} parent=1 // pred_fallthru
      _
    %798 = vsyncpa [#allocation3], 1
    %799 = vsyncpa [#allocation6], 1
    %800 = vsyncpa [#allocation9], 1
    %801 = vsyncpa [#allocation4], 1

</llo_original>
